<compile_context>
chip_gen: v6e
topology: v6e:2x2x1
jax: 0.10.0
libtpu: 0.0.40
codegen_flags: <defaults>
</compile_context>

<pallas_src>
import functools

import jax
import jax.numpy as jnp
from jax import lax
from jax.experimental import pallas as pl
from jax.experimental.pallas import tpu as pltpu


def _round_up(v, m):
    return ((v + m - 1) // m) * m


def _pad2(a, rows, cols):
    return jnp.pad(a, ((0, rows - a.shape[0]), (0, cols - a.shape[1])))


def _stable_softplus(x):
    # softplus(x) = max(x, 0) + log1p(exp(-|x|))  -- no overflow for any x.
    return jnp.maximum(x, 0.0) + jnp.log1p(jnp.exp(-jnp.abs(x)))


# ----------------------------------------------------------------------------
# Pass 1: elementwise softplus(W_rho)**2, computed once per call (hoisted out of
# the per-batch-tile loop of the main kernel).
# ----------------------------------------------------------------------------
def softplus_sq_kernel(rho_ref, out_ref):
    s = _stable_softplus(rho_ref[...])
    out_ref[...] = s * s


# ----------------------------------------------------------------------------
# Pass 2: tiled (m, n, k) BBB linear forward.
#   x tile        : (tm, tk)
#   W_mu tile     : (tn, tk)   -- PyTorch (out, in) layout, no host transpose
#   W_sigma^2 tile: (tn, tk)
#   bias tiles    : (1, tn)
#   eps / out     : (tm, tn)
#   scratch       : two f32 (tm, tn) accumulators (mean path, variance path)
# ----------------------------------------------------------------------------
def bbb_linear_kernel(x_ref, wmu_ref, wsig2_ref, bmu_ref, brho_ref, eps_ref,
                      out_ref, acc_mu_ref, acc_var_ref):
    k = pl.program_id(2)

    @pl.when(k == 0)
    def _init():
        acc_mu_ref[...] = jnp.zeros_like(acc_mu_ref)
        acc_var_ref[...] = jnp.zeros_like(acc_var_ref)

    x = x_ref[...]                                      # (tm, tk)
    # Contract dim 1 of x with dim 1 of the (out, in)-layout weight tile,
    # i.e. x @ W.T, directly on the MXU — no wrapper-side transpose.
    dims = (((1,), (1,)), ((), ()))
    acc_mu_ref[...] += lax.dot_general(
        x, wmu_ref[...], dims, preferred_element_type=jnp.float32)
    acc_var_ref[...] += lax.dot_general(
        x * x, wsig2_ref[...], dims, preferred_element_type=jnp.float32)

    @pl.when(k == pl.num_programs(2) - 1)
    def _epilogue():
        b_sigma = _stable_softplus(brho_ref[...])       # (1, tn)
        act_mu = acc_mu_ref[...] + bmu_ref[...]
        act_var = acc_var_ref[...] + b_sigma * b_sigma + jnp.float32(1e-16)
        out_ref[...] = (act_mu + jnp.sqrt(act_var) * eps_ref[...]).astype(
            out_ref.dtype)


@functools.partial(jax.jit, static_argnames=("tm", "tn", "tk"))
def bbb_linear_forward(x, W_mu, W_rho, bias_mu, bias_rho, eps,
                       *, tm=256, tn=512, tk=512):
    """x: (B, in_f); W_mu/W_rho: (out_f, in_f) (PyTorch layout);
    bias_mu/bias_rho: (out_f,); eps: (B, out_f) ~ N(0,1)."""
    B, in_f = x.shape
    out_f, in_f2 = W_mu.shape
    assert in_f == in_f2 and eps.shape == (B, out_f)

    # Effective tile sizes (clamped for small problems, kept (8,128)-aligned).
    tm_e = min(tm, _round_up(B, 8))
    tk_e = min(tk, _round_up(in_f, 128))
    tn_e = min(tn, _round_up(out_f, 128))

    Bp = _round_up(B, tm_e)
    in_p = _round_up(in_f, tk_e)
    out_p = _round_up(out_f, tn_e)

    # Zero padding is safe: padded x columns are 0, so padded-K weight entries
    # contribute nothing; padded output columns/rows are sliced off at the end.
    x_p = _pad2(x.astype(jnp.float32), Bp, in_p)
    wmu_p = _pad2(W_mu.astype(jnp.float32), out_p, in_p)
    wrho_p = _pad2(W_rho.astype(jnp.float32), out_p, in_p)
    eps_p = _pad2(eps.astype(jnp.float32), Bp, out_p)
    bmu_p = jnp.pad(bias_mu.astype(jnp.float32), (0, out_p - out_f)).reshape(1, out_p)
    brho_p = jnp.pad(bias_rho.astype(jnp.float32), (0, out_p - out_f)).reshape(1, out_p)

    # ---- Pass 1: W_sigma^2 (softplus hoisted out of the batch loop) ----
    w_sig2 = pl.pallas_call(
        softplus_sq_kernel,
        out_shape=jax.ShapeDtypeStruct((out_p, in_p), jnp.float32),
        grid=(out_p // tn_e, in_p // tk_e),
        in_specs=[pl.BlockSpec((tn_e, tk_e), lambda i, j: (i, j))],
        out_specs=pl.BlockSpec((tn_e, tk_e), lambda i, j: (i, j)),
        compiler_params=pltpu.CompilerParams(
            dimension_semantics=("parallel", "parallel")),
        cost_estimate=pl.CostEstimate(
            flops=2 * out_p * in_p,
            transcendentals=2 * out_p * in_p,
            bytes_accessed=2 * out_p * in_p * 4),
    )(wrho_p)

    # ---- Pass 2: tiled matmuls + reparameterization ----
    grid = (Bp // tm_e, out_p // tn_e, in_p // tk_e)
    out_padded = pl.pallas_call(
        bbb_linear_kernel,
        out_shape=jax.ShapeDtypeStruct((Bp, out_p), jnp.float32),
        grid=grid,
        in_specs=[
            pl.BlockSpec((tm_e, tk_e), lambda i, j, k: (i, k)),   # x
            pl.BlockSpec((tn_e, tk_e), lambda i, j, k: (j, k)),   # W_mu (out,in)
            pl.BlockSpec((tn_e, tk_e), lambda i, j, k: (j, k)),   # W_sigma^2
            pl.BlockSpec((1, tn_e), lambda i, j, k: (0, j)),      # bias_mu
            pl.BlockSpec((1, tn_e), lambda i, j, k: (0, j)),      # bias_rho
            pl.BlockSpec((tm_e, tn_e), lambda i, j, k: (i, j)),   # eps
        ],
        out_specs=pl.BlockSpec((tm_e, tn_e), lambda i, j, k: (i, j)),
        scratch_shapes=[pltpu.VMEM((tm_e, tn_e), jnp.float32),
                        pltpu.VMEM((tm_e, tn_e), jnp.float32)],
        compiler_params=pltpu.CompilerParams(
            dimension_semantics=("parallel", "parallel", "arbitrary"),
            vmem_limit_bytes=48 * 1024 * 1024),
        cost_estimate=pl.CostEstimate(
            flops=4 * Bp * in_p * out_p,
            transcendentals=2 * out_p,
            bytes_accessed=(2 * out_p * in_p + Bp * in_p
                            + 3 * Bp * out_p + 2 * out_p) * 4),
    )(x_p, wmu_p, w_sig2, bmu_p, brho_p, eps_p)

    return out_padded[:B, :out_f]


if __name__ == "__main__":
    batch = 8
    in_features = 32
    out_features = 32

    key = jax.random.PRNGKey(0)
    k_x, k_wmu, k_bmu, k_eps = jax.random.split(key, 4)

    # Deterministic parameter init mirroring reset_parameters():
    #   W_mu, bias_mu ~ N(0, 0.1); W_rho, bias_rho = -3
    x = jax.random.normal(k_x, (batch, in_features), dtype=jnp.float32)
    W_mu = 0.1 * jax.random.normal(k_wmu, (out_features, in_features), jnp.float32)
    W_rho = jnp.full((out_features, in_features), -3.0, jnp.float32)
    bias_mu = 0.1 * jax.random.normal(k_bmu, (out_features,), jnp.float32)
    bias_rho = jnp.full((out_features,), -3.0, jnp.float32)
    eps = jax.random.normal(k_eps, (batch, out_features), jnp.float32)

    out = bbb_linear_forward(x, W_mu, W_rho, bias_mu, bias_rho, eps)
    out = jax.block_until_ready(out)

    # Reference in plain JAX (same math as the PyTorch module).
    W_sigma = jnp.log1p(jnp.exp(W_rho))
    bias_sigma = jnp.log1p(jnp.exp(bias_rho))
    act_mu = x @ W_mu.T + bias_mu
    act_var = 1e-16 + (x * x) @ (W_sigma * W_sigma).T + bias_sigma ** 2
    ref = act_mu + jnp.sqrt(act_var) * eps
    assert out.shape == ref.shape
    assert jnp.allclose(out, ref, atol=1e-5, rtol=1e-5), "mismatch vs reference"

    print("KERNEL_OK")
</pallas_src>

<mosaic_0001>
module attributes {stable_mosaic.version = 11 : i64} {
  func.func @softplus_sq_kernel(%arg0: i32, %arg1: i32, %arg2: memref<128x128xf32, #tpu.memory_space<vmem>>, %arg3: memref<128x128xf32, #tpu.memory_space<vmem>>) attributes {dimension_semantics = [#tpu.dimension_semantics<parallel>, #tpu.dimension_semantics<parallel>], iteration_bounds = array<i64: 1, 1>, scalar_prefetch = 0 : i64, scratch_operands = 0 : i64, tpu.core_type = #tpu.core_type<tc>, window_params = [{transform_indices = @transform_0, window_bounds = array<i64: 128, 128>}, {transform_indices = @transform_1, window_bounds = array<i64: 128, 128>}]} {
    %c0 = arith.constant 0 : index
    %c0_0 = arith.constant 0 : index
    %0 = vector.load %arg2[%c0, %c0_0] : memref<128x128xf32, #tpu.memory_space<vmem>>, vector<128x128xf32>
    %cst = arith.constant 0.000000e+00 : f32
    %1 = vector.broadcast %cst : f32 to vector<128x128xf32>
    %2 = arith.maximumf %0, %1 : vector<128x128xf32>
    %3 = math.absf %0 : vector<128x128xf32>
    %cst_1 = arith.constant 0.000000e+00 : f32
    %4 = vector.broadcast %cst_1 : f32 to vector<128x128xf32>
    %5 = arith.subf %4, %3 : vector<128x128xf32>
    %6 = math.exp %5 : vector<128x128xf32>
    %7 = math.log1p %6 : vector<128x128xf32>
    %8 = arith.addf %2, %7 : vector<128x128xf32>
    %9 = arith.mulf %8, %8 : vector<128x128xf32>
    %c0_2 = arith.constant 0 : index
    %c0_3 = arith.constant 0 : index
    %10 = vector.load %arg3[%c0_2, %c0_3] : memref<128x128xf32, #tpu.memory_space<vmem>>, vector<128x128xf32>
    tpu.vector_store %arg3[%c0_2, %c0_3], %9 {strides = array<i32>} : memref<128x128xf32, #tpu.memory_space<vmem>>, vector<128x128xf32>,
    return
  }
  func.func @transform_0(%arg0: i32, %arg1: i32) -> (i32, i32) {
    %c0_i32 = arith.constant 0 : i32
    return %arg0, %arg1 : i32, i32
  }
  func.func @transform_1(%arg0: i32, %arg1: i32) -> (i32, i32) {
    %c0_i32 = arith.constant 0 : i32
    return %arg0, %arg1 : i32, i32
  }
}

module attributes {stable_mosaic.version = 11 : i64} {
  func.func @bbb_linear_kernel(%arg0: i32, %arg1: i32, %arg2: i32, %arg3: memref<8x128xf32, #tpu.memory_space<vmem>>, %arg4: memref<128x128xf32, #tpu.memory_space<vmem>>, %arg5: memref<128x128xf32, #tpu.memory_space<vmem>>, %arg6: memref<1x128xf32, #tpu.memory_space<vmem>>, %arg7: memref<1x128xf32, #tpu.memory_space<vmem>>, %arg8: memref<8x128xf32, #tpu.memory_space<vmem>>, %arg9: memref<8x128xf32, #tpu.memory_space<vmem>>, %arg10: memref<8x128xf32, #tpu.memory_space<vmem>>, %arg11: memref<8x128xf32, #tpu.memory_space<vmem>>) attributes {dimension_semantics = [#tpu.dimension_semantics<parallel>, #tpu.dimension_semantics<parallel>, #tpu.dimension_semantics<arbitrary>], iteration_bounds = array<i64: 1, 1, 1>, scalar_prefetch = 0 : i64, scratch_operands = 2 : i64, tpu.core_type = #tpu.core_type<tc>, window_params = [{transform_indices = @transform_0, window_bounds = array<i64: 8, 128>}, {transform_indices = @transform_1, window_bounds = array<i64: 128, 128>}, {transform_indices = @transform_2, window_bounds = array<i64: 128, 128>}, {transform_indices = @transform_3, window_bounds = array<i64: 1, 128>}, {transform_indices = @transform_4, window_bounds = array<i64: 1, 128>}, {transform_indices = @transform_5, window_bounds = array<i64: 8, 128>}, {transform_indices = @transform_6, window_bounds = array<i64: 8, 128>}]} {
    %c0_i32 = arith.constant 0 : i32
    %0 = arith.cmpi eq, %arg2, %c0_i32 : i32
    %1 = arith.extui %0 : i1 to i32
    %c0_i32_0 = arith.constant 0 : i32
    %2 = arith.cmpi ne, %1, %c0_i32_0 : i32
    scf.if %2 {
      %cst_17 = arith.constant 0.000000e+00 : f32
      %18 = vector.broadcast %cst_17 : f32 to vector<8x128xf32>
      %c0_18 = arith.constant 0 : index
      %c0_19 = arith.constant 0 : index
      %19 = vector.load %arg10[%c0_18, %c0_19] : memref<8x128xf32, #tpu.memory_space<vmem>>, vector<8x128xf32>
      tpu.vector_store %arg10[%c0_18, %c0_19], %18 {strides = array<i32>} : memref<8x128xf32, #tpu.memory_space<vmem>>, vector<8x128xf32>,
      %cst_20 = arith.constant 0.000000e+00 : f32
      %20 = vector.broadcast %cst_20 : f32 to vector<8x128xf32>
      %c0_21 = arith.constant 0 : index
      %c0_22 = arith.constant 0 : index
      %21 = vector.load %arg11[%c0_21, %c0_22] : memref<8x128xf32, #tpu.memory_space<vmem>>, vector<8x128xf32>
      tpu.vector_store %arg11[%c0_21, %c0_22], %20 {strides = array<i32>} : memref<8x128xf32, #tpu.memory_space<vmem>>, vector<8x128xf32>,
    } else {
    }
    %c0 = arith.constant 0 : index
    %c0_1 = arith.constant 0 : index
    %3 = vector.load %arg3[%c0, %c0_1] : memref<8x128xf32, #tpu.memory_space<vmem>>, vector<8x128xf32>
    %c0_2 = arith.constant 0 : index
    %c0_3 = arith.constant 0 : index
    %4 = vector.load %arg10[%c0_2, %c0_3] : memref<8x128xf32, #tpu.memory_space<vmem>>, vector<8x128xf32>
    %c0_4 = arith.constant 0 : index
    %c0_5 = arith.constant 0 : index
    %5 = vector.load %arg4[%c0_4, %c0_5] : memref<128x128xf32, #tpu.memory_space<vmem>>, vector<128x128xf32>
    %cst = arith.constant dense<0.000000e+00> : vector<8x128xf32>
    %6 = tpu.matmul %3, %5, %cst {dimension_numbers = #tpu.dot_dimension_numbers<[1], [1], [0], [0], [0, 0, 1, 0], [], []>} : vector<8x128xf32>, vector<128x128xf32>, vector<8x128xf32> -> vector<8x128xf32>
    %7 = arith.addf %4, %6 : vector<8x128xf32>
    %c0_6 = arith.constant 0 : index
    %c0_7 = arith.constant 0 : index
    %8 = vector.load %arg10[%c0_6, %c0_7] : memref<8x128xf32, #tpu.memory_space<vmem>>, vector<8x128xf32>
    tpu.vector_store %arg10[%c0_6, %c0_7], %7 {strides = array<i32>} : memref<8x128xf32, #tpu.memory_space<vmem>>, vector<8x128xf32>,
    %c0_8 = arith.constant 0 : index
    %c0_9 = arith.constant 0 : index
    %9 = vector.load %arg11[%c0_8, %c0_9] : memref<8x128xf32, #tpu.memory_space<vmem>>, vector<8x128xf32>
    %10 = arith.mulf %3, %3 : vector<8x128xf32>
    %c0_10 = arith.constant 0 : index
    %c0_11 = arith.constant 0 : index
    %11 = vector.load %arg5[%c0_10, %c0_11] : memref<128x128xf32, #tpu.memory_space<vmem>>, vector<128x128xf32>
    %cst_12 = arith.constant dense<0.000000e+00> : vector<8x128xf32>
    %12 = tpu.matmul %10, %11, %cst_12 {dimension_numbers = #tpu.dot_dimension_numbers<[1], [1], [0], [0], [0, 0, 1, 0], [], []>} : vector<8x128xf32>, vector<128x128xf32>, vector<8x128xf32> -> vector<8x128xf32>
    %13 = arith.addf %9, %12 : vector<8x128xf32>
    %c0_13 = arith.constant 0 : index
    %c0_14 = arith.constant 0 : index
    %14 = vector.load %arg11[%c0_13, %c0_14] : memref<8x128xf32, #tpu.memory_space<vmem>>, vector<8x128xf32>
    tpu.vector_store %arg11[%c0_13, %c0_14], %13 {strides = array<i32>} : memref<8x128xf32, #tpu.memory_space<vmem>>, vector<8x128xf32>,
    %c0_i32_15 = arith.constant 0 : i32
    %15 = arith.cmpi eq, %arg2, %c0_i32_15 : i32
    %16 = arith.extui %15 : i1 to i32
    %c0_i32_16 = arith.constant 0 : i32
    %17 = arith.cmpi ne, %16, %c0_i32_16 : i32
    scf.if %17 {
      %c0_17 = arith.constant 0 : index
      %c0_18 = arith.constant 0 : index
      %18 = vector.load %arg7[%c0_17, %c0_18] : memref<1x128xf32, #tpu.memory_space<vmem>>, vector<1x128xf32>
      %cst_19 = arith.constant 0.000000e+00 : f32
      %19 = vector.broadcast %cst_19 : f32 to vector<1x128xf32>
      %20 = arith.maximumf %18, %19 : vector<1x128xf32>
      %21 = math.absf %18 : vector<1x128xf32>
      %cst_20 = arith.constant 0.000000e+00 : f32
      %22 = vector.broadcast %cst_20 : f32 to vector<1x128xf32>
      %23 = arith.subf %22, %21 : vector<1x128xf32>
      %24 = math.exp %23 : vector<1x128xf32>
      %25 = math.log1p %24 : vector<1x128xf32>
      %26 = arith.addf %20, %25 : vector<1x128xf32>
      %c0_21 = arith.constant 0 : index
      %c0_22 = arith.constant 0 : index
      %27 = vector.load %arg10[%c0_21, %c0_22] : memref<8x128xf32, #tpu.memory_space<vmem>>, vector<8x128xf32>
      %c0_23 = arith.constant 0 : index
      %c0_24 = arith.constant 0 : index
      %28 = vector.load %arg6[%c0_23, %c0_24] : memref<1x128xf32, #tpu.memory_space<vmem>>, vector<1x128xf32>
      %29 = vector.broadcast %28 : vector<1x128xf32> to vector<8x128xf32>
      %30 = arith.addf %27, %29 : vector<8x128xf32>
      %c0_25 = arith.constant 0 : index
      %c0_26 = arith.constant 0 : index
      %31 = vector.load %arg11[%c0_25, %c0_26] : memref<8x128xf32, #tpu.memory_space<vmem>>, vector<8x128xf32>
      %32 = arith.mulf %26, %26 : vector<1x128xf32>
      %33 = vector.broadcast %32 : vector<1x128xf32> to vector<8x128xf32>
      %34 = arith.addf %31, %33 : vector<8x128xf32>
      %cst_27 = arith.constant 1.000000e-16 : f32
      %35 = vector.broadcast %cst_27 : f32 to vector<8x128xf32>
      %36 = arith.addf %34, %35 : vector<8x128xf32>
      %37 = math.sqrt %36 : vector<8x128xf32>
      %c0_28 = arith.constant 0 : index
      %c0_29 = arith.constant 0 : index
      %38 = vector.load %arg8[%c0_28, %c0_29] : memref<8x128xf32, #tpu.memory_space<vmem>>, vector<8x128xf32>
      %39 = arith.mulf %37, %38 : vector<8x128xf32>
      %40 = arith.addf %30, %39 : vector<8x128xf32>
      %c0_30 = arith.constant 0 : index
      %c0_31 = arith.constant 0 : index
      %41 = vector.load %arg9[%c0_30, %c0_31] : memref<8x128xf32, #tpu.memory_space<vmem>>, vector<8x128xf32>
      tpu.vector_store %arg9[%c0_30, %c0_31], %40 {strides = array<i32>} : memref<8x128xf32, #tpu.memory_space<vmem>>, vector<8x128xf32>,
    } else {
    }
    return
  }
  func.func @transform_0(%arg0: i32, %arg1: i32, %arg2: i32) -> (i32, i32) {
    %c0_i32 = arith.constant 0 : i32
    return %arg0, %arg2 : i32, i32
  }
  func.func @transform_1(%arg0: i32, %arg1: i32, %arg2: i32) -> (i32, i32) {
    %c0_i32 = arith.constant 0 : i32
    return %arg1, %arg2 : i32, i32
  }
  func.func @transform_2(%arg0: i32, %arg1: i32, %arg2: i32) -> (i32, i32) {
    %c0_i32 = arith.constant 0 : i32
    return %arg1, %arg2 : i32, i32
  }
  func.func @transform_3(%arg0: i32, %arg1: i32, %arg2: i32) -> (i32, i32) {
    %c0_i32 = arith.constant 0 : i32
    %c0_i32_0 = arith.constant 0 : i32
    return %c0_i32, %arg1 : i32, i32
  }
  func.func @transform_4(%arg0: i32, %arg1: i32, %arg2: i32) -> (i32, i32) {
    %c0_i32 = arith.constant 0 : i32
    %c0_i32_0 = arith.constant 0 : i32
    return %c0_i32, %arg1 : i32, i32
  }
  func.func @transform_5(%arg0: i32, %arg1: i32, %arg2: i32) -> (i32, i32) {
    %c0_i32 = arith.constant 0 : i32
    return %arg0, %arg1 : i32, i32
  }
  func.func @transform_6(%arg0: i32, %arg1: i32, %arg2: i32) -> (i32, i32) {
    %c0_i32 = arith.constant 0 : i32
    return %arg0, %arg1 : i32, i32
  }
}

</mosaic_0001>

<llo_original>
// kernel: bbb_linear_forward.2
$region0: #{bbb_linear_forward.2}
  #allocation0 [shape = 'u32[]', space=smem, size = 0x4, offset = 0x4, fixed_abs, tag = 'smem constant byte address 0x4 - core index']
  #allocation1 [shape = 'u32[144,128]{1,0:T(1,128)}', space=vmem, size = 0x12000, scoped, tag = 'internal scratch']
  %s0 = inlined_call_operand.vmem [shape: f32[128,128], index: 0, kind: input, shape index: {}]
  %s1 = inlined_call_operand.vmem [shape: f32[128,128], index: 1, kind: output, shape index: {}]
  %s2 = sld [smem:[#allocation0]]
  $region14: #{bbb_linear_forward.2} parent=0
    _
  %s4 = ssub.s32 1, %s2
  %s5 = scalar_select 0, %s4, %s2
  // Predicated region
  $region2: #{bbb_linear_forward.2} parent=0 // pred_check
    _
  $region3: #{bbb_linear_forward.2} parent=0 // pred_check_branch
    %7 = sbr.rel (0) target = $region5
  $region4: #{bbb_linear_forward.2} parent=0 // pred_region
    _
  $region5: #{bbb_linear_forward.2} parent=0 // pred_fallthru
    _
  %v8 = vld [vmem:[%s0] sm:$0xff]
  %v9 = vld [vmem:[%s0 + $0x8] sm:$0xff]
  %v10 = vld [vmem:[%s0 + $0x10] sm:$0xff]
  %v11 = vld [vmem:[%s0 + $0x18] sm:$0xff]
  %v12 = vld [vmem:[%s0 + $0x20] sm:$0xff]
  %v13 = vld [vmem:[%s0 + $0x28] sm:$0xff]
  %v14 = vld [vmem:[%s0 + $0x30] sm:$0xff]
  %v15 = vld [vmem:[%s0 + $0x38] sm:$0xff]
  %v16 = vld [vmem:[%s0 + $0x40] sm:$0xff]
  %v17 = vld [vmem:[%s0 + $0x48] sm:$0xff]
  %v18 = vld [vmem:[%s0 + $0x50] sm:$0xff]
  %v19 = vld [vmem:[%s0 + $0x58] sm:$0xff]
  %v20 = vld [vmem:[%s0 + $0x60] sm:$0xff]
  %v21 = vld [vmem:[%s0 + $0x68] sm:$0xff]
  %v22 = vld [vmem:[%s0 + $0x70] sm:$0xff]
  %v23 = vld [vmem:[%s0 + $0x78] sm:$0xff]
  %v24 = vmax.f32 %v8, 0.0
  %v25 = vmax.f32 %v9, 0.0
  %v26 = vmax.f32 %v10, 0.0
  %v27 = vmax.f32 %v11, 0.0
  %v28 = vmax.f32 %v12, 0.0
  %v29 = vmax.f32 %v13, 0.0
  %v30 = vmax.f32 %v14, 0.0
  %v31 = vmax.f32 %v15, 0.0
  %v32 = vmax.f32 %v16, 0.0
  %v33 = vmax.f32 %v17, 0.0
  %v34 = vmax.f32 %v18, 0.0
  %v35 = vmax.f32 %v19, 0.0
  %v36 = vmax.f32 %v20, 0.0
  %v37 = vmax.f32 %v21, 0.0
  %v38 = vmax.f32 %v22, 0.0
  %v39 = vmax.f32 %v23, 0.0
  %v40 = vand.u32 2147483647, %v8
  %v41 = vand.u32 2147483647, %v9
  %v42 = vand.u32 2147483647, %v10
  %v43 = vand.u32 2147483647, %v11
  %v44 = vand.u32 2147483647, %v12
  %v45 = vand.u32 2147483647, %v13
  %v46 = vand.u32 2147483647, %v14
  %v47 = vand.u32 2147483647, %v15
  %v48 = vand.u32 2147483647, %v16
  %v49 = vand.u32 2147483647, %v17
  %v50 = vand.u32 2147483647, %v18
  %v51 = vand.u32 2147483647, %v19
  %v52 = vand.u32 2147483647, %v20
  %v53 = vand.u32 2147483647, %v21
  %v54 = vand.u32 2147483647, %v22
  %v55 = vand.u32 2147483647, %v23
  %v56 = vsub.f32 0.0, %v40
  %v57 = vsub.f32 0.0, %v41
  %v58 = vsub.f32 0.0, %v42
  %v59 = vsub.f32 0.0, %v43
  %v60 = vsub.f32 0.0, %v44
  %v61 = vsub.f32 0.0, %v45
  %v62 = vsub.f32 0.0, %v46
  %v63 = vsub.f32 0.0, %v47
  %v64 = vsub.f32 0.0, %v48
  %v65 = vsub.f32 0.0, %v49
  %v66 = vsub.f32 0.0, %v50
  %v67 = vsub.f32 0.0, %v51
  %v68 = vsub.f32 0.0, %v52
  %v69 = vsub.f32 0.0, %v53
  %v70 = vsub.f32 0.0, %v54
  %v71 = vsub.f32 0.0, %v55
  %v72 = vmul.f32 %v56, 1.442695
  %v73 = vpow.pop %v72
  %v74 = vmul.f32 %v57, 1.442695
  %v75 = vpow.pop %v74
  %v76 = vmul.f32 %v58, 1.442695
  %v77 = vpow.pop %v76
  %v78 = vmul.f32 %v59, 1.442695
  %v79 = vpow.pop %v78
  %v80 = vmul.f32 %v60, 1.442695
  %v81 = vpow.pop %v80
  %v82 = vmul.f32 %v61, 1.442695
  %v83 = vpow.pop %v82
  %v84 = vmul.f32 %v62, 1.442695
  %v85 = vpow.pop %v84
  %v86 = vmul.f32 %v63, 1.442695
  %v87 = vpow.pop %v86
  %v88 = vmul.f32 %v64, 1.442695
  %v89 = vpow.pop %v88
  %v90 = vmul.f32 %v65, 1.442695
  %v91 = vpow.pop %v90
  %v92 = vmul.f32 %v66, 1.442695
  %v93 = vpow.pop %v92
  %v94 = vmul.f32 %v67, 1.442695
  %v95 = vpow.pop %v94
  %v96 = vmul.f32 %v68, 1.442695
  %v97 = vpow.pop %v96
  %v98 = vmul.f32 %v69, 1.442695
  %v99 = vpow.pop %v98
  %v100 = vmul.f32 %v70, 1.442695
  %v101 = vpow.pop %v100
  %v102 = vmul.f32 %v71, 1.442695
  %v103 = vpow.pop %v102
  %v104 = vadd.f32 %v73, 1.0
  %v105 = vlog2.pop %v104
  %v106 = vmul.f32 %v105, 0.6931472
  %v107 = vmul.f32 -0.5, %v73
  %v108 = vadd.f32 %v107, 1.0
  %v109 = vmul.f32 %v108, %v73
  %v110 = vand.u32 2147483647, %v73
  %vm111 = vcmp.lt.f32.partialorder %v110, 0.0004427343
  %v112 = vsel %vm111, %v109, %v106
  %v113 = vadd.f32 %v75, 1.0
  %v114 = vlog2.pop %v113
  %v115 = vmul.f32 %v114, 0.6931472
  %v116 = vmul.f32 -0.5, %v75
  %v117 = vadd.f32 %v116, 1.0
  %v118 = vmul.f32 %v117, %v75
  %v119 = vand.u32 2147483647, %v75
  %vm120 = vcmp.lt.f32.partialorder %v119, 0.0004427343
  %v121 = vsel %vm120, %v118, %v115
  %v122 = vadd.f32 %v77, 1.0
  %v123 = vlog2.pop %v122
  %v124 = vmul.f32 %v123, 0.6931472
  %v125 = vmul.f32 -0.5, %v77
  %v126 = vadd.f32 %v125, 1.0
  %v127 = vmul.f32 %v126, %v77
  %v128 = vand.u32 2147483647, %v77
  %vm129 = vcmp.lt.f32.partialorder %v128, 0.0004427343
  %v130 = vsel %vm129, %v127, %v124
  %v131 = vadd.f32 %v79, 1.0
  %v132 = vlog2.pop %v131
  %v133 = vmul.f32 %v132, 0.6931472
  %v134 = vmul.f32 -0.5, %v79
  %v135 = vadd.f32 %v134, 1.0
  %v136 = vmul.f32 %v135, %v79
  %v137 = vand.u32 2147483647, %v79
  %vm138 = vcmp.lt.f32.partialorder %v137, 0.0004427343
  %v139 = vsel %vm138, %v136, %v133
  %v140 = vadd.f32 %v81, 1.0
  %v141 = vlog2.pop %v140
  %v142 = vmul.f32 %v141, 0.6931472
  %v143 = vmul.f32 -0.5, %v81
  %v144 = vadd.f32 %v143, 1.0
  %v145 = vmul.f32 %v144, %v81
  %v146 = vand.u32 2147483647, %v81
  %vm147 = vcmp.lt.f32.partialorder %v146, 0.0004427343
  %v148 = vsel %vm147, %v145, %v142
  %v149 = vadd.f32 %v83, 1.0
  %v150 = vlog2.pop %v149
  %v151 = vmul.f32 %v150, 0.6931472
  %v152 = vmul.f32 -0.5, %v83
  %v153 = vadd.f32 %v152, 1.0
  %v154 = vmul.f32 %v153, %v83
  %v155 = vand.u32 2147483647, %v83
  %vm156 = vcmp.lt.f32.partialorder %v155, 0.0004427343
  %v157 = vsel %vm156, %v154, %v151
  %v158 = vadd.f32 %v85, 1.0
  %v159 = vlog2.pop %v158
  %v160 = vmul.f32 %v159, 0.6931472
  %v161 = vmul.f32 -0.5, %v85
  %v162 = vadd.f32 %v161, 1.0
  %v163 = vmul.f32 %v162, %v85
  %v164 = vand.u32 2147483647, %v85
  %vm165 = vcmp.lt.f32.partialorder %v164, 0.0004427343
  %v166 = vsel %vm165, %v163, %v160
  %v167 = vadd.f32 %v87, 1.0
  %v168 = vlog2.pop %v167
  %v169 = vmul.f32 %v168, 0.6931472
  %v170 = vmul.f32 -0.5, %v87
  %v171 = vadd.f32 %v170, 1.0
  %v172 = vmul.f32 %v171, %v87
  %v173 = vand.u32 2147483647, %v87
  %vm174 = vcmp.lt.f32.partialorder %v173, 0.0004427343
  %v175 = vsel %vm174, %v172, %v169
  %v176 = vadd.f32 %v89, 1.0
  %v177 = vlog2.pop %v176
  %v178 = vmul.f32 %v177, 0.6931472
  %v179 = vmul.f32 -0.5, %v89
  %v180 = vadd.f32 %v179, 1.0
  %v181 = vmul.f32 %v180, %v89
  %v182 = vand.u32 2147483647, %v89
  %vm183 = vcmp.lt.f32.partialorder %v182, 0.0004427343
  %v184 = vsel %vm183, %v181, %v178
  %v185 = vadd.f32 %v91, 1.0
  %v186 = vlog2.pop %v185
  %v187 = vmul.f32 %v186, 0.6931472
  %v188 = vmul.f32 -0.5, %v91
  %v189 = vadd.f32 %v188, 1.0
  %v190 = vmul.f32 %v189, %v91
  %v191 = vand.u32 2147483647, %v91
  %vm192 = vcmp.lt.f32.partialorder %v191, 0.0004427343
  %v193 = vsel %vm192, %v190, %v187
  %v194 = vadd.f32 %v93, 1.0
  %v195 = vlog2.pop %v194
  %v196 = vmul.f32 %v195, 0.6931472
  %v197 = vmul.f32 -0.5, %v93
  %v198 = vadd.f32 %v197, 1.0
  %v199 = vmul.f32 %v198, %v93
  %v200 = vand.u32 2147483647, %v93
  %vm201 = vcmp.lt.f32.partialorder %v200, 0.0004427343
  %v202 = vsel %vm201, %v199, %v196
  %v203 = vadd.f32 %v95, 1.0
  %v204 = vlog2.pop %v203
  %v205 = vmul.f32 %v204, 0.6931472
  %v206 = vmul.f32 -0.5, %v95
  %v207 = vadd.f32 %v206, 1.0
  %v208 = vmul.f32 %v207, %v95
  %v209 = vand.u32 2147483647, %v95
  %vm210 = vcmp.lt.f32.partialorder %v209, 0.0004427343
  %v211 = vsel %vm210, %v208, %v205
  %v212 = vadd.f32 %v97, 1.0
  %v213 = vlog2.pop %v212
  %v214 = vmul.f32 %v213, 0.6931472
  %v215 = vmul.f32 -0.5, %v97
  %v216 = vadd.f32 %v215, 1.0
  %v217 = vmul.f32 %v216, %v97
  %v218 = vand.u32 2147483647, %v97
  %vm219 = vcmp.lt.f32.partialorder %v218, 0.0004427343
  %v220 = vsel %vm219, %v217, %v214
  %v221 = vadd.f32 %v99, 1.0
  %v222 = vlog2.pop %v221
  %v223 = vmul.f32 %v222, 0.6931472
  %v224 = vmul.f32 -0.5, %v99
  %v225 = vadd.f32 %v224, 1.0
  %v226 = vmul.f32 %v225, %v99
  %v227 = vand.u32 2147483647, %v99
  %vm228 = vcmp.lt.f32.partialorder %v227, 0.0004427343
  %v229 = vsel %vm228, %v226, %v223
  %v230 = vadd.f32 %v101, 1.0
  %v231 = vlog2.pop %v230
  %v232 = vmul.f32 %v231, 0.6931472
  %v233 = vmul.f32 -0.5, %v101
  %v234 = vadd.f32 %v233, 1.0
  %v235 = vmul.f32 %v234, %v101
  %v236 = vand.u32 2147483647, %v101
  %vm237 = vcmp.lt.f32.partialorder %v236, 0.0004427343
  %v238 = vsel %vm237, %v235, %v232
  %v239 = vadd.f32 %v103, 1.0
  %v240 = vlog2.pop %v239
  %v241 = vmul.f32 %v240, 0.6931472
  %v242 = vmul.f32 -0.5, %v103
  %v243 = vadd.f32 %v242, 1.0
  %v244 = vmul.f32 %v243, %v103
  %v245 = vand.u32 2147483647, %v103
  %vm246 = vcmp.lt.f32.partialorder %v245, 0.0004427343
  %v247 = vsel %vm246, %v244, %v241
  %v248 = vadd.f32 %v24, %v112
  %v249 = vadd.f32 %v25, %v121
  %v250 = vadd.f32 %v26, %v130
  %v251 = vadd.f32 %v27, %v139
  %v252 = vadd.f32 %v28, %v148
  %v253 = vadd.f32 %v29, %v157
  %v254 = vadd.f32 %v30, %v166
  %v255 = vadd.f32 %v31, %v175
  %v256 = vadd.f32 %v32, %v184
  %v257 = vadd.f32 %v33, %v193
  %v258 = vadd.f32 %v34, %v202
  %v259 = vadd.f32 %v35, %v211
  %v260 = vadd.f32 %v36, %v220
  %v261 = vadd.f32 %v37, %v229
  %v262 = vadd.f32 %v38, %v238
  %v263 = vadd.f32 %v39, %v247
  %v264 = vmul.f32 %v248, %v248
  %v265 = vmul.f32 %v249, %v249
  %v266 = vmul.f32 %v250, %v250
  %v267 = vmul.f32 %v251, %v251
  %v268 = vmul.f32 %v252, %v252
  %v269 = vmul.f32 %v253, %v253
  %v270 = vmul.f32 %v254, %v254
  %v271 = vmul.f32 %v255, %v255
  %v272 = vmul.f32 %v256, %v256
  %v273 = vmul.f32 %v257, %v257
  %v274 = vmul.f32 %v258, %v258
  %v275 = vmul.f32 %v259, %v259
  %v276 = vmul.f32 %v260, %v260
  %v277 = vmul.f32 %v261, %v261
  %v278 = vmul.f32 %v262, %v262
  %v279 = vmul.f32 %v263, %v263
  %280 = vst [vmem:[%s1] sm:$0xff] %v264
  %281 = vst [vmem:[%s1 + $0x8] sm:$0xff] %v265
  %282 = vst [vmem:[%s1 + $0x10] sm:$0xff] %v266
  %283 = vst [vmem:[%s1 + $0x18] sm:$0xff] %v267
  %284 = vst [vmem:[%s1 + $0x20] sm:$0xff] %v268
  %285 = vst [vmem:[%s1 + $0x28] sm:$0xff] %v269
  %286 = vst [vmem:[%s1 + $0x30] sm:$0xff] %v270
  %287 = vst [vmem:[%s1 + $0x38] sm:$0xff] %v271
  %288 = vst [vmem:[%s1 + $0x40] sm:$0xff] %v272
  %289 = vst [vmem:[%s1 + $0x48] sm:$0xff] %v273
  %290 = vst [vmem:[%s1 + $0x50] sm:$0xff] %v274
  %291 = vst [vmem:[%s1 + $0x58] sm:$0xff] %v275
  %292 = vst [vmem:[%s1 + $0x60] sm:$0xff] %v276
  %293 = vst [vmem:[%s1 + $0x68] sm:$0xff] %v277
  %294 = vst [vmem:[%s1 + $0x70] sm:$0xff] %v278
  %295 = vst [vmem:[%s1 + $0x78] sm:$0xff] %v279
  // Predicated region
  $region6: #{bbb_linear_forward.2} parent=0 // pred_check
    _
  $region7: #{bbb_linear_forward.2} parent=0 // pred_check_branch
    %297 = sbr.rel (0) target = $region9
  $region8: #{bbb_linear_forward.2} parent=0 // pred_region
    _
  $region9: #{bbb_linear_forward.2} parent=0 // pred_fallthru
    _
  // Predicated region
  $region10: #{bbb_linear_forward.2} parent=0 // pred_check
    _
  $region11: #{bbb_linear_forward.2} parent=0 // pred_check_branch
    %299 = sbr.rel (0) target = $region13
  $region12: #{bbb_linear_forward.2} parent=0 // pred_region
    _
  $region13: #{bbb_linear_forward.2} parent=0 // pred_fallthru
    _

// kernel: bbb_linear_forward.3
$region0: #{bbb_linear_forward.3}
  #allocation0 [shape = 'u32[]', space=smem, size = 0x4, offset = 0x4, fixed_abs, tag = 'smem constant byte address 0x4 - core index']
  #allocation1 [shape = 'u32[144,128]{1,0:T(1,128)}', space=vmem, size = 0x12000, scoped, tag = 'internal scratch']
  #allocation2 [shape = 'f32[8,128]{1,0:T(8,128)}', space=vmem, size = 0x1000, scoped, tag = 'scratch operand']
  #allocation3 [shape = 'f32[8,128]{1,0:T(8,128)}', space=vmem, size = 0x1000, scoped, tag = 'scratch operand']
  %s0 = inlined_call_operand.vmem [shape: f32[8,128], index: 0, kind: input, shape index: {}]
  %s1 = inlined_call_operand.vmem [shape: f32[128,128], index: 1, kind: input, shape index: {}]
  %s2 = inlined_call_operand.vmem [shape: f32[128,128], index: 2, kind: input, shape index: {}]
  %s3 = inlined_call_operand.vmem [shape: f32[1,128], index: 3, kind: input, shape index: {}]
  %s4 = inlined_call_operand.vmem [shape: f32[1,128], index: 4, kind: input, shape index: {}]
  %s5 = inlined_call_operand.vmem [shape: f32[8,128], index: 5, kind: input, shape index: {}]
  %s6 = inlined_call_operand.hbm [shape: f32[8,128], index: 6, kind: output, shape index: {}]
  %s7 = sld [smem:[#allocation0]]
  $region42: #{bbb_linear_forward.3} parent=0
    _
  %s9 = ssub.s32 1, %s7
  %s10 = scalar_select 0, %s9, %s7
  $region1: #{bbb_linear_forward.3} parent=0
    #allocation4 [shape = 'u8[4096]{0}', space=vmem, size = 0x1000, scoped, tag = 'output window, operand 0, single buffered']
    #allocation5 [shape = 's32[1]{0}', space=sflag, size = 0x4, scoped, tag = 'scoped memory for bbb_linear_forward.3']
    %11 = vsyncpa [#allocation5], 0
    // Predicated region
    $region2: #{bbb_linear_forward.3} parent=1 // pred_check
      _
    $region3: #{bbb_linear_forward.3} parent=1 // pred_check_branch
      %13 = sbr.rel (0) target = $region5
    $region4: #{bbb_linear_forward.3} parent=1 // pred_region
      _
    $region5: #{bbb_linear_forward.3} parent=1 // pred_fallthru
      _
    // Predicated region
    $region6: #{bbb_linear_forward.3} parent=1 // pred_check
      _
    $region7: #{bbb_linear_forward.3} parent=1 // pred_check_branch
      %15 = sbr.rel (0) target = $region9
    $region8: #{bbb_linear_forward.3} parent=1 // pred_region
      _
    $region9: #{bbb_linear_forward.3} parent=1 // pred_fallthru
      _
    // Predicated region
    $region10: #{bbb_linear_forward.3} parent=1 // pred_check
      _
    $region11: #{bbb_linear_forward.3} parent=1 // pred_check_branch
      %17 = sbr.rel (0) target = $region13
    $region12: #{bbb_linear_forward.3} parent=1 // pred_region
      _
    $region13: #{bbb_linear_forward.3} parent=1 // pred_fallthru
      _
    // Predicated region
    $region14: #{bbb_linear_forward.3} parent=1 // pred_check
      _
    $region15: #{bbb_linear_forward.3} parent=1 // pred_check_branch
      %19 = sbr.rel (0) target = $region17
    $region16: #{bbb_linear_forward.3} parent=1 // pred_region
      _
    $region17: #{bbb_linear_forward.3} parent=1 // pred_fallthru
      _
    // Predicated region
    $region18: #{bbb_linear_forward.3} parent=1 // pred_check
      _
    $region19: #{bbb_linear_forward.3} parent=1 // pred_check_branch
      %21 = sbr.rel (0) target = $region21
    $region20: #{bbb_linear_forward.3} parent=1 // pred_region
      _
    $region21: #{bbb_linear_forward.3} parent=1 // pred_fallthru
      _
    // Predicated region
    $region22: #{bbb_linear_forward.3} parent=1 // pred_check
      _
    $region23: #{bbb_linear_forward.3} parent=1 // pred_check_branch
      %23 = sbr.rel (0) target = $region25
    $region24: #{bbb_linear_forward.3} parent=1 // pred_region
      _
    $region25: #{bbb_linear_forward.3} parent=1 // pred_fallthru
      _
    %p24 = scmp.eq.s32.totalorder 0, 0
    // Predicated region
    $region26: #{bbb_linear_forward.3} parent=1 // pred_check
      %p25 = pneg %p24
    $region27: #{bbb_linear_forward.3} parent=1 // pred_check_branch
      %27 = sbr.rel (%p25) target = $region29
    $region28: #{bbb_linear_forward.3} parent=1 // pred_region
      %28 = vst [vmem:[#allocation2] sm:$0xff] 0.0
      %29 = vst [vmem:[#allocation3] sm:$0xff] 0.0
    $region29: #{bbb_linear_forward.3} parent=1 // pred_fallthru
      _
    %v30 = vld [vmem:[%s0] sm:$0xff]
    %v31 = vld [vmem:[#allocation2] sm:$0xff]
    %v32 = vld [vmem:[%s1] sm:$0xff]
    %v33 = vld [vmem:[%s1 + $0x8] sm:$0xff]
    %v34 = vld [vmem:[%s1 + $0x10] sm:$0xff]
    %v35 = vld [vmem:[%s1 + $0x18] sm:$0xff]
    %v36 = vld [vmem:[%s1 + $0x20] sm:$0xff]
    %v37 = vld [vmem:[%s1 + $0x28] sm:$0xff]
    %v38 = vld [vmem:[%s1 + $0x30] sm:$0xff]
    %v39 = vld [vmem:[%s1 + $0x38] sm:$0xff]
    %v40 = vld [vmem:[%s1 + $0x40] sm:$0xff]
    %v41 = vld [vmem:[%s1 + $0x48] sm:$0xff]
    %v42 = vld [vmem:[%s1 + $0x50] sm:$0xff]
    %v43 = vld [vmem:[%s1 + $0x58] sm:$0xff]
    %v44 = vld [vmem:[%s1 + $0x60] sm:$0xff]
    %v45 = vld [vmem:[%s1 + $0x68] sm:$0xff]
    %v46 = vld [vmem:[%s1 + $0x70] sm:$0xff]
    %v47 = vld [vmem:[%s1 + $0x78] sm:$0xff]
    %48 = vmatprep.subr.mxu0 0.0
    %49 = vmatpush1.xpose.msra.mxu0 %v47
    %50 = vmatprep.subr.mxu0 0.0
    %51 = vmatpush1.xpose.msra.mxu0 %v46
    %52 = vmatprep.subr.mxu0 0.0
    %53 = vmatpush1.xpose.msra.mxu0 %v45
    %54 = vmatprep.subr.mxu0 0.0
    %55 = vmatpush1.xpose.msra.mxu0 %v44
    %56 = vmatprep.subr.mxu0 0.0
    %57 = vmatpush1.xpose.msra.mxu0 %v43
    %58 = vmatprep.subr.mxu0 0.0
    %59 = vmatpush1.xpose.msra.mxu0 %v42
    %60 = vmatprep.subr.mxu0 0.0
    %61 = vmatpush1.xpose.msra.mxu0 %v41
    %62 = vmatprep.subr.mxu0 0.0
    %63 = vmatpush1.xpose.msra.mxu0 %v40
    %64 = vmatprep.subr.mxu0 0.0
    %65 = vmatpush1.xpose.msra.mxu0 %v39
    %66 = vmatprep.subr.mxu0 0.0
    %67 = vmatpush1.xpose.msra.mxu0 %v38
    %68 = vmatprep.subr.mxu0 0.0
    %69 = vmatpush1.xpose.msra.mxu0 %v37
    %70 = vmatprep.subr.mxu0 0.0
    %71 = vmatpush1.xpose.msra.mxu0 %v36
    %72 = vmatprep.subr.mxu0 0.0
    %73 = vmatpush1.xpose.msra.mxu0 %v35
    %74 = vmatprep.subr.mxu0 0.0
    %75 = vmatpush1.xpose.msra.mxu0 %v34
    %76 = vmatprep.subr.mxu0 0.0
    %77 = vmatpush1.xpose.msra.mxu0 %v33
    %78 = vmatprep.subr.mxu0 0.0
    %79 = vmatpush1.xpose.msra.mxu0 %v32
    %80 = vmatprep.subr.mxu0 0.0
    %81 = vmatpush2.xpose.msra.mxu0 0.0
    %82 = vmatprep.subr.mxu0 0.0
    %83 = vmatpush2.xpose.msra.mxu0 0.0
    %84 = vmatprep.subr.mxu0 0.0
    %85 = vmatpush2.xpose.msra.mxu0 0.0
    %86 = vmatprep.subr.mxu0 0.0
    %87 = vmatpush2.xpose.msra.mxu0 0.0
    %88 = vmatprep.subr.mxu0 0.0
    %89 = vmatpush2.xpose.msra.mxu0 0.0
    %90 = vmatprep.subr.mxu0 0.0
    %91 = vmatpush2.xpose.msra.mxu0 0.0
    %92 = vmatprep.subr.mxu0 0.0
    %93 = vmatpush2.xpose.msra.mxu0 0.0
    %94 = vmatprep.subr.mxu0 0.0
    %95 = vmatpush2.xpose.msra.mxu0 0.0
    %96 = vmatprep.subr.mxu0 0.0
    %97 = vmatpush2.xpose.msra.mxu0 0.0
    %98 = vmatprep.subr.mxu0 0.0
    %99 = vmatpush2.xpose.msra.mxu0 0.0
    %100 = vmatprep.subr.mxu0 0.0
    %101 = vmatpush2.xpose.msra.mxu0 0.0
    %102 = vmatprep.subr.mxu0 0.0
    %103 = vmatpush2.xpose.msra.mxu0 0.0
    %104 = vmatprep.subr.mxu0 0.0
    %105 = vmatpush2.xpose.msra.mxu0 0.0
    %106 = vmatprep.subr.mxu0 0.0
    %107 = vmatpush2.xpose.msra.mxu0 0.0
    %108 = vmatprep.subr.mxu0 0.0
    %109 = vmatpush2.xpose.msra.mxu0 0.0
    %110 = vmatprep.subr.mxu0 0.0
    %111 = vmatpush2.xpose.msra.mxu0 0.0
    %112 = vmatprep.mubr.f32.mxu0 0.0
    %113 = vmatmul.mubr.f32.gmra.mxu0 %v30
    %v114 = vpop.f32.mrf.mxu0
    %v115 = vadd.f32 0.0, %v114
    %v116 = vpop.f32.mrf.mxu0
    %117 = vdwg.mxu0
    %v118 = vadd.f32 %v31, %v115
    %119 = vst [vmem:[#allocation2] sm:$0xff] %v118
    %v120 = vld [vmem:[#allocation3] sm:$0xff]
    %v121 = vmul.f32 %v30, %v30
    %v122 = vld [vmem:[%s2] sm:$0xff]
    %v123 = vld [vmem:[%s2 + $0x8] sm:$0xff]
    %v124 = vld [vmem:[%s2 + $0x10] sm:$0xff]
    %v125 = vld [vmem:[%s2 + $0x18] sm:$0xff]
    %v126 = vld [vmem:[%s2 + $0x20] sm:$0xff]
    %v127 = vld [vmem:[%s2 + $0x28] sm:$0xff]
    %v128 = vld [vmem:[%s2 + $0x30] sm:$0xff]
    %v129 = vld [vmem:[%s2 + $0x38] sm:$0xff]
    %v130 = vld [vmem:[%s2 + $0x40] sm:$0xff]
    %v131 = vld [vmem:[%s2 + $0x48] sm:$0xff]
    %v132 = vld [vmem:[%s2 + $0x50] sm:$0xff]
    %v133 = vld [vmem:[%s2 + $0x58] sm:$0xff]
    %v134 = vld [vmem:[%s2 + $0x60] sm:$0xff]
    %v135 = vld [vmem:[%s2 + $0x68] sm:$0xff]
    %v136 = vld [vmem:[%s2 + $0x70] sm:$0xff]
    %v137 = vld [vmem:[%s2 + $0x78] sm:$0xff]
    %138 = vmatprep.subr.mxu0 0.0
    %139 = vmatpush1.xpose.msra.mxu0 %v137
    %140 = vmatprep.subr.mxu0 0.0
    %141 = vmatpush1.xpose.msra.mxu0 %v136
    %142 = vmatprep.subr.mxu0 0.0
    %143 = vmatpush1.xpose.msra.mxu0 %v135
    %144 = vmatprep.subr.mxu0 0.0
    %145 = vmatpush1.xpose.msra.mxu0 %v134
    %146 = vmatprep.subr.mxu0 0.0
    %147 = vmatpush1.xpose.msra.mxu0 %v133
    %148 = vmatprep.subr.mxu0 0.0
    %149 = vmatpush1.xpose.msra.mxu0 %v132
    %150 = vmatprep.subr.mxu0 0.0
    %151 = vmatpush1.xpose.msra.mxu0 %v131
    %152 = vmatprep.subr.mxu0 0.0
    %153 = vmatpush1.xpose.msra.mxu0 %v130
    %154 = vmatprep.subr.mxu0 0.0
    %155 = vmatpush1.xpose.msra.mxu0 %v129
    %156 = vmatprep.subr.mxu0 0.0
    %157 = vmatpush1.xpose.msra.mxu0 %v128
    %158 = vmatprep.subr.mxu0 0.0
    %159 = vmatpush1.xpose.msra.mxu0 %v127
    %160 = vmatprep.subr.mxu0 0.0
    %161 = vmatpush1.xpose.msra.mxu0 %v126
    %162 = vmatprep.subr.mxu0 0.0
    %163 = vmatpush1.xpose.msra.mxu0 %v125
    %164 = vmatprep.subr.mxu0 0.0
    %165 = vmatpush1.xpose.msra.mxu0 %v124
    %166 = vmatprep.subr.mxu0 0.0
    %167 = vmatpush1.xpose.msra.mxu0 %v123
    %168 = vmatprep.subr.mxu0 0.0
    %169 = vmatpush1.xpose.msra.mxu0 %v122
    %170 = vmatprep.subr.mxu0 0.0
    %171 = vmatpush2.xpose.msra.mxu0 0.0
    %172 = vmatprep.subr.mxu0 0.0
    %173 = vmatpush2.xpose.msra.mxu0 0.0
    %174 = vmatprep.subr.mxu0 0.0
    %175 = vmatpush2.xpose.msra.mxu0 0.0
    %176 = vmatprep.subr.mxu0 0.0
    %177 = vmatpush2.xpose.msra.mxu0 0.0
    %178 = vmatprep.subr.mxu0 0.0
    %179 = vmatpush2.xpose.msra.mxu0 0.0
    %180 = vmatprep.subr.mxu0 0.0
    %181 = vmatpush2.xpose.msra.mxu0 0.0
    %182 = vmatprep.subr.mxu0 0.0
    %183 = vmatpush2.xpose.msra.mxu0 0.0
    %184 = vmatprep.subr.mxu0 0.0
    %185 = vmatpush2.xpose.msra.mxu0 0.0
    %186 = vmatprep.subr.mxu0 0.0
    %187 = vmatpush2.xpose.msra.mxu0 0.0
    %188 = vmatprep.subr.mxu0 0.0
    %189 = vmatpush2.xpose.msra.mxu0 0.0
    %190 = vmatprep.subr.mxu0 0.0
    %191 = vmatpush2.xpose.msra.mxu0 0.0
    %192 = vmatprep.subr.mxu0 0.0
    %193 = vmatpush2.xpose.msra.mxu0 0.0
    %194 = vmatprep.subr.mxu0 0.0
    %195 = vmatpush2.xpose.msra.mxu0 0.0
    %196 = vmatprep.subr.mxu0 0.0
    %197 = vmatpush2.xpose.msra.mxu0 0.0
    %198 = vmatprep.subr.mxu0 0.0
    %199 = vmatpush2.xpose.msra.mxu0 0.0
    %200 = vmatprep.subr.mxu0 0.0
    %201 = vmatpush2.xpose.msra.mxu0 0.0
    %202 = vmatprep.mubr.f32.mxu0 0.0
    %203 = vmatmul.mubr.f32.gmra.mxu0 %v121
    %v204 = vpop.f32.mrf.mxu0
    %v205 = vadd.f32 0.0, %v204
    %v206 = vpop.f32.mrf.mxu0
    %207 = vdwg.mxu0
    %v208 = vadd.f32 %v120, %v205
    %209 = vst [vmem:[#allocation3] sm:$0xff] %v208
    // Predicated region
    $region30: #{bbb_linear_forward.3} parent=1 // pred_check
      %p210 = pneg %p24
    $region31: #{bbb_linear_forward.3} parent=1 // pred_check_branch
      %212 = sbr.rel (%p210) target = $region33
    $region32: #{bbb_linear_forward.3} parent=1 // pred_region
      %v213 = vld [vmem:[%s4] sm:$0x1]
      %v214 = vmax.f32 %v213, 0.0
      %v215 = vand.u32 2147483647, %v213
      %v216 = vsub.f32 0.0, %v215
      %v217 = vmul.f32 %v216, 1.442695
      %v218 = vpow.pop %v217
      %v219 = vadd.f32 %v218, 1.0
      %v220 = vlog2.pop %v219
      %v221 = vmul.f32 %v220, 0.6931472
      %v222 = vmul.f32 -0.5, %v218
      %v223 = vadd.f32 %v222, 1.0
      %v224 = vmul.f32 %v223, %v218
      %v225 = vand.u32 2147483647, %v218
      %vm226 = vcmp.lt.f32.partialorder %v225, 0.0004427343
      %v227 = vsel %vm226, %v224, %v221
      %v228 = vadd.f32 %v214, %v227
      %v229 = vld [vmem:[#allocation2] sm:$0xff]
      %v230 = vld [vmem:[%s3] sm:$0x1]
      %v232 = vlaneseq
      %v233 = vshrl.u32 %v232, 7
      %v234 = vsub.s32 0, %v233
      %v235 = vrot.slane %v230, %v234
      %v237 = vadd.f32 %v229, %v235
      %v238 = vld [vmem:[#allocation3] sm:$0xff]
      %v239 = vmul.f32 %v228, %v228
      %v241 = vlaneseq
      %v242 = vshrl.u32 %v241, 7
      %v243 = vsub.s32 0, %v242
      %v244 = vrot.slane %v239, %v243
      %v246 = vadd.f32 %v238, %v244
      %v247 = vadd.f32 %v246, 1e-16
      %v248 = vrsqrt.pop %v247
      %v249 = vmul.f32 %v247, %v248
      %vm250 = vcmp.eq.f32.partialorder %v247, inf
      %v251 = vsel %vm250, %v247, %v249
      %vm252 = vcmp.eq.f32.partialorder %v247, 0.0
      %v253 = vand.u32 %v247, 2147483648
      %v254 = vsel %vm252, %v253, %v251
      %v255 = vld [vmem:[%s5] sm:$0xff]
      %v256 = vmul.f32 %v254, %v255
      %v257 = vadd.f32 %v237, %v256
      %258 = vst [vmem:[#allocation4] sm:$0xff] %v257
    $region33: #{bbb_linear_forward.3} parent=1 // pred_fallthru
      _
    // Predicated region
    $region34: #{bbb_linear_forward.3} parent=1 // pred_check
      _
    $region35: #{bbb_linear_forward.3} parent=1 // pred_check_branch
      %260 = sbr.rel (0) target = $region37
    $region36: #{bbb_linear_forward.3} parent=1 // pred_region
      %s262 = ssub.s32 128, 128
      %263 = vsyncadd [#allocation5], %s262
      %s265 = sshll.u32 [#allocation4], 4
      %s266 = int_to_ptr.vmem [resolvable:$true] %s265
      %268 = dma.vmem_to_hbm [thread:$0]  %s266, 128, %s6, [#allocation5]
    $region37: #{bbb_linear_forward.3} parent=1 // pred_fallthru
      _
    // Predicated region
    $region38: #{bbb_linear_forward.3} parent=1 // pred_check
      _
    $region39: #{bbb_linear_forward.3} parent=1 // pred_check_branch
      %270 = sbr.rel (0) target = $region41
    $region40: #{bbb_linear_forward.3} parent=1 // pred_region
      %271 = dma.done [#allocation5], 128
    $region41: #{bbb_linear_forward.3} parent=1 // pred_fallthru
      _
    %272 = vsyncpa [#allocation5], 1

</llo_original>
